<compile_context>
chip_gen: v6e
topology: v6e:2x2x1
jax: 0.10.0
libtpu: 0.0.40
codegen_flags: <defaults>
</compile_context>

<pallas_src>
import jax
import jax.numpy as jnp
from jax.experimental import pallas as pl
from jax.experimental.pallas import tpu as pltpu


# ----------------------------- helpers --------------------------------------

def _round_up(x, m):
    return ((x + m - 1) // m) * m


# ----------------------------- Pallas kernel --------------------------------

def _patch_embed_kernel(a_ref, w_ref, bias_ref, o_ref):
    """One (tm, N) output tile: full-K matmul (weight resident) + bias."""
    acc = jnp.dot(a_ref[...], w_ref[...], preferred_element_type=jnp.float32)
    o_ref[...] = (acc + bias_ref[...]).astype(o_ref.dtype)


def patch_embed_matmul(patches, w_t, bias, out_dtype=jnp.float32):
    """patches: (M, K), w_t: (K, N), bias: (N,) -> (M, N) in out_dtype."""
    M, K = patches.shape
    Kw, N = w_t.shape
    assert K == Kw, (K, Kw)

    # Lane/sublane-friendly padding (zeros contribute nothing to the dot).
    K_pad = _round_up(max(K, 128), 128)
    N_pad = _round_up(max(N, 128), 128)

    # M tile: big tiles for realistic M, next_power_of_2 fallback for toy M.
    if M >= 512:
        tm = 512
    else:
        tm = max(8, min(512, pl.next_power_of_2(M)))
    M_pad = _round_up(M, tm)

    a = patches.astype(jnp.bfloat16)
    w = w_t.astype(jnp.bfloat16)
    b = bias.astype(jnp.float32).reshape(1, N)

    if (M_pad, K_pad) != (M, K):
        a = jnp.pad(a, ((0, M_pad - M), (0, K_pad - K)))
    if (K_pad, N_pad) != (K, N):
        w = jnp.pad(w, ((0, K_pad - K), (0, N_pad - N)))
    if N_pad != N:
        b = jnp.pad(b, ((0, 0), (0, N_pad - N)))

    grid = (M_pad // tm,)

    # Explicit VMEM budget: double-buffered patch/output tiles + resident
    # weight (count 2x to be safe) + bias + headroom.  Sized to fit v7x (64 MiB
    # physical) as well as v5e/v6e.
    out_bytes = jnp.dtype(out_dtype).itemsize
    vmem_bytes = (2 * tm * K_pad * 2          # patch tiles (bf16)
                  + 2 * K_pad * N_pad * 2     # weight (bf16)
                  + 2 * N_pad * 4             # bias (f32)
                  + 2 * tm * N_pad * out_bytes
                  + (2 << 20))
    vmem_bytes = int(min(vmem_bytes, 64 << 20))

    cost = pl.CostEstimate(
        flops=2 * M_pad * K_pad * N_pad,
        transcendentals=0,
        bytes_accessed=(M_pad * K_pad * 2 + K_pad * N_pad * 2
                        + N_pad * 4 + M_pad * N_pad * out_bytes),
    )

    out = pl.pallas_call(
        _patch_embed_kernel,
        out_shape=jax.ShapeDtypeStruct((M_pad, N_pad), out_dtype),
        grid_spec=pltpu.PrefetchScalarGridSpec(
            num_scalar_prefetch=0,
            grid=grid,
            in_specs=[
                pl.BlockSpec((tm, K_pad), lambda i: (i, 0)),      # patch tile
                pl.BlockSpec((K_pad, N_pad), lambda i: (0, 0)),   # weight (resident)
                pl.BlockSpec((1, N_pad), lambda i: (0, 0)),       # bias (resident)
            ],
            out_specs=pl.BlockSpec((tm, N_pad), lambda i: (i, 0)),
        ),
        compiler_params=pltpu.CompilerParams(
            dimension_semantics=("parallel",),
            vmem_limit_bytes=vmem_bytes,
        ),
        cost_estimate=cost,
    )(a, w, b)

    return out[:M, :N]


# ------------------------------ Module wrapper -------------------------------

class PatchEmbed3DPallas:
    """JAX/Pallas equivalent of the PyTorch PatchEmbed3D (norm_layer=None)."""

    def __init__(self, img_size, patch_size, in_chans, embed_dim,
                 flatten=True, bias=True, key=None, dtype=jnp.float32):
        self.img_size = tuple(img_size)
        self.patch_size = tuple(patch_size)
        self.grid_size = (
            img_size[0] // patch_size[0],
            img_size[1] // patch_size[1],
            img_size[2] // patch_size[2],
        )
        self.num_patches = self.grid_size[0] * self.grid_size[1] * self.grid_size[2]
        self.flatten = flatten
        self.in_chans = in_chans
        self.embed_dim = embed_dim

        # Deterministic parameter init (Conv3d weight shape: (E, C, pD, pH, pW)).
        pD, pH, pW = self.patch_size
        kW, kB = jax.random.split(key)
        fan_in = in_chans * pD * pH * pW
        bound = 1.0 / (fan_in ** 0.5)
        self.weight = jax.random.uniform(
            kW, (embed_dim, in_chans, pD, pH, pW), dtype, -bound, bound)
        if bias:
            self.bias = jax.random.uniform(kB, (embed_dim,), dtype, -bound, bound)
        else:
            self.bias = jnp.zeros((embed_dim,), dtype)
        # TODO(synk): norm_layer is Identity here (module default); a LayerNorm
        # variant would need an extra normalization step.

    def __call__(self, x):
        B, C, D, H, W = x.shape
        assert self.img_size == (D, H, W)
        assert self.in_chans == C
        pD, pH, pW = self.patch_size
        Gd, Gh, Gw = self.grid_size
        E = self.embed_dim

        # --- glue: extract non-overlapping patches (plain-JAX, in bf16 so the
        #     unavoidable NCDHW transpose moves half the HBM bytes) ---
        # TODO(synk): a channels-last activation layout upstream would make the
        # patch reshape layout-free; with NCDHW input this pre-pass stays in XLA.
        xb = x.astype(jnp.bfloat16)
        xp = xb.reshape(B, C, Gd, pD, Gh, pH, Gw, pW)
        xp = xp.transpose(0, 2, 4, 6, 1, 3, 5, 7)
        patches = xp.reshape(B * Gd * Gh * Gw, C * pD * pH * pW)   # (M, K)

        w_t = self.weight.reshape(E, C * pD * pH * pW).T           # (K, N)

        # --- hot path: Pallas matmul + bias ---
        out = patch_embed_matmul(patches, w_t, self.bias, out_dtype=x.dtype)

        out = out.reshape(B, Gd * Gh * Gw, E)  # == flatten(2).transpose(1, 2)
        if not self.flatten:
            out = out.reshape(B, Gd, Gh, Gw, E).transpose(0, 4, 1, 2, 3)
        return out


# ---------------------------------- main -------------------------------------

if __name__ == "__main__":
    key = jax.random.PRNGKey(0)
    k_x, k_params = jax.random.split(key)

    # Small shapes consistent with the module: 3D volume, patch (2, 8, 8).
    B, C = 2, 3
    img_size = (4, 16, 16)          # (D, H, W)
    patch_size = (2, 8, 8)
    embed_dim = 32

    x = jax.random.normal(k_x, (B, C) + img_size, dtype=jnp.float32)

    mod = PatchEmbed3DPallas(img_size, patch_size, C, embed_dim,
                             flatten=True, bias=True, key=k_params)
    out = jax.block_until_ready(mod(x))

    # Pure-JAX references (conv-as-matmul) for sanity checks.
    pD, pH, pW = patch_size
    Gd, Gh, Gw = mod.grid_size
    xp = x.reshape(B, C, Gd, pD, Gh, pH, Gw, pW).transpose(0, 2, 4, 6, 1, 3, 5, 7)
    patches_f32 = xp.reshape(B * Gd * Gh * Gw, C * pD * pH * pW)
    w_f32 = mod.weight.reshape(embed_dim, -1).T

    # (a) tight check against a reference using the same bf16-rounded operands.
    ref_bf16 = (patches_f32.astype(jnp.bfloat16).astype(jnp.float32)
                @ w_f32.astype(jnp.bfloat16).astype(jnp.float32) + mod.bias)
    ref_bf16 = ref_bf16.reshape(B, Gd * Gh * Gw, embed_dim)

    # (b) loose check against the full-f32 reference (bf16 input rounding).
    ref_f32 = (patches_f32 @ w_f32 + mod.bias).reshape(B, Gd * Gh * Gw, embed_dim)

    assert out.shape == (B, mod.num_patches, embed_dim), out.shape
    assert jnp.allclose(out, ref_bf16, atol=1e-3, rtol=1e-3), "mismatch vs bf16 ref"
    assert jnp.allclose(out, ref_f32, atol=2e-2, rtol=2e-2), "mismatch vs f32 ref"

    print("KERNEL_OK")
</pallas_src>

<mosaic_0001>
module attributes {stable_mosaic.version = 11 : i64} {
  func.func @_patch_embed_kernel(%arg0: i32, %arg1: memref<16x384xbf16, #tpu.memory_space<vmem>>, %arg2: memref<384x128xbf16, #tpu.memory_space<vmem>>, %arg3: memref<1x128xf32, #tpu.memory_space<vmem>>, %arg4: memref<16x128xf32, #tpu.memory_space<vmem>>) attributes {dimension_semantics = [#tpu.dimension_semantics<parallel>], iteration_bounds = array<i64: 1>, scalar_prefetch = 0 : i64, scratch_operands = 0 : i64, tpu.core_type = #tpu.core_type<tc>, window_params = [{transform_indices = @transform_0, window_bounds = array<i64: 16, 384>}, {pipeline_mode = #tpu.pipeline_mode<synchronous>, transform_indices = @transform_1, window_bounds = array<i64: 384, 128>}, {pipeline_mode = #tpu.pipeline_mode<synchronous>, transform_indices = @transform_2, window_bounds = array<i64: 1, 128>}, {transform_indices = @transform_3, window_bounds = array<i64: 16, 128>}]} {
    %c0 = arith.constant 0 : index
    %c0_0 = arith.constant 0 : index
    %0 = vector.load %arg1[%c0, %c0_0] : memref<16x384xbf16, #tpu.memory_space<vmem>>, vector<16x384xbf16>
    %c0_1 = arith.constant 0 : index
    %c0_2 = arith.constant 0 : index
    %1 = vector.load %arg2[%c0_1, %c0_2] : memref<384x128xbf16, #tpu.memory_space<vmem>>, vector<384x128xbf16>
    %cst = arith.constant dense<0.000000e+00> : vector<16x128xf32>
    %2 = tpu.matmul %0, %1, %cst {dimension_numbers = #tpu.dot_dimension_numbers<[1], [0], [0], [1], [0, 0, 1, 1], [], []>} : vector<16x384xbf16>, vector<384x128xbf16>, vector<16x128xf32> -> vector<16x128xf32>
    %c0_3 = arith.constant 0 : index
    %c0_4 = arith.constant 0 : index
    %3 = vector.load %arg3[%c0_3, %c0_4] : memref<1x128xf32, #tpu.memory_space<vmem>>, vector<1x128xf32>
    %4 = vector.broadcast %3 : vector<1x128xf32> to vector<16x128xf32>
    %5 = arith.addf %2, %4 : vector<16x128xf32>
    %c0_5 = arith.constant 0 : index
    %c0_6 = arith.constant 0 : index
    %6 = vector.load %arg4[%c0_5, %c0_6] : memref<16x128xf32, #tpu.memory_space<vmem>>, vector<16x128xf32>
    tpu.vector_store %arg4[%c0_5, %c0_6], %5 {strides = array<i32>} : memref<16x128xf32, #tpu.memory_space<vmem>>, vector<16x128xf32>,
    return
  }
  func.func @transform_0(%arg0: i32) -> (i32, i32) {
    %c0_i32 = arith.constant 0 : i32
    %c0_i32_0 = arith.constant 0 : i32
    return %arg0, %c0_i32 : i32, i32
  }
  func.func @transform_1(%arg0: i32) -> (i32, i32) {
    %c0_i32 = arith.constant 0 : i32
    %c0_i32_0 = arith.constant 0 : i32
    %c0_i32_1 = arith.constant 0 : i32
    return %c0_i32, %c0_i32_0 : i32, i32
  }
  func.func @transform_2(%arg0: i32) -> (i32, i32) {
    %c0_i32 = arith.constant 0 : i32
    %c0_i32_0 = arith.constant 0 : i32
    %c0_i32_1 = arith.constant 0 : i32
    return %c0_i32, %c0_i32_0 : i32, i32
  }
  func.func @transform_3(%arg0: i32) -> (i32, i32) {
    %c0_i32 = arith.constant 0 : i32
    %c0_i32_0 = arith.constant 0 : i32
    return %arg0, %c0_i32 : i32, i32
  }
}

</mosaic_0001>

<llo_original>
// kernel: tpu_custom_call.1
$region0: #{tpu_custom_call.1}
  #allocation0 [shape = 'u32[]', space=smem, size = 0x4, offset = 0x4, fixed_abs, tag = 'smem constant byte address 0x4 - core index']
  #allocation1 [shape = 'u32[144,128]{1,0:T(1,128)}', space=vmem, size = 0x12000, scoped, tag = 'internal scratch']
  %s0 = inlined_call_operand.hbm [shape: bf16[16,384], index: 0, kind: input, shape index: {}]
  %s1 = inlined_call_operand.hbm [shape: bf16[384,128], index: 1, kind: input, shape index: {}]
  %s2 = inlined_call_operand.vmem [shape: f32[1,128], index: 2, kind: input, shape index: {}]
  %s3 = inlined_call_operand.hbm [shape: f32[16,128], index: 3, kind: output, shape index: {}]
  %s4 = sld [smem:[#allocation0]]
  $region30: #{tpu_custom_call.1} parent=0
    _
  %s6 = ssub.s32 1, %s4
  %s7 = scalar_select 0, %s6, %s4
  $region1: #{tpu_custom_call.1} parent=0
    #allocation2 [shape = 'u8[12288]{0}', space=vmem, size = 0x3000, scoped, tag = 'input window, operand 0, single buffered']
    #allocation3 [shape = 's32[1]{0}', space=sflag, size = 0x4, scoped, tag = 'scoped memory for tpu_custom_call.1']
    #allocation4 [shape = 's32[1]{0}', space=sflag, size = 0x4, scoped, tag = 'scoped memory for tpu_custom_call.1']
    #allocation5 [shape = 'u8[98304]{0}', space=vmem, size = 0x18000, scoped, tag = 'input window, operand 1, single buffered']
    #allocation6 [shape = 's32[1]{0}', space=sflag, size = 0x4, scoped, tag = 'scoped memory for tpu_custom_call.1']
    #allocation7 [shape = 'u8[8192]{0}', space=vmem, size = 0x2000, scoped, tag = 'output window, operand 0, single buffered']
    %8 = vsyncpa [#allocation3], 0
    %9 = vsyncpa [#allocation6], 0
    %10 = vsyncpa [#allocation4], 0
    // Predicated region
    $region2: #{tpu_custom_call.1} parent=1 // pred_check
      _
    $region3: #{tpu_custom_call.1} parent=1 // pred_check_branch
      %12 = sbr.rel (0) target = $region5
    $region4: #{tpu_custom_call.1} parent=1 // pred_region
      %s14 = ssub.s32 384, 384
      %15 = vsyncadd [#allocation3], %s14
      %s16 = sshll.u32 [#allocation2], 4
      %s17 = int_to_ptr.vmem [resolvable:$true] %s16
      %22 = dma.hbm_to_vmem [thread:$0]  %s0, 384, %s17, [#allocation3], 192, 192, 12
    $region5: #{tpu_custom_call.1} parent=1 // pred_fallthru
      _
    // Predicated region
    $region6: #{tpu_custom_call.1} parent=1 // pred_check
      _
    $region7: #{tpu_custom_call.1} parent=1 // pred_check_branch
      %24 = sbr.rel (0) target = $region9
    $region8: #{tpu_custom_call.1} parent=1 // pred_region
      %s26 = ssub.s32 3072, 3072
      %27 = vsyncadd [#allocation6], %s26
      %s28 = sshll.u32 [#allocation5], 4
      %s29 = int_to_ptr.vmem [resolvable:$true] %s28
      %34 = dma.hbm_to_vmem [thread:$0]  %s1, 3072, %s29, [#allocation6], 64, 64, 4
    $region9: #{tpu_custom_call.1} parent=1 // pred_fallthru
      _
    // Predicated region
    $region10: #{tpu_custom_call.1} parent=1 // pred_check
      _
    $region11: #{tpu_custom_call.1} parent=1 // pred_check_branch
      %36 = sbr.rel (0) target = $region13
    $region12: #{tpu_custom_call.1} parent=1 // pred_region
      _
    $region13: #{tpu_custom_call.1} parent=1 // pred_fallthru
      _
    // Predicated region
    $region14: #{tpu_custom_call.1} parent=1 // pred_check
      _
    $region15: #{tpu_custom_call.1} parent=1 // pred_check_branch
      %38 = sbr.rel (0) target = $region17
    $region16: #{tpu_custom_call.1} parent=1 // pred_region
      %39 = dma.done [#allocation3], 384
    $region17: #{tpu_custom_call.1} parent=1 // pred_fallthru
      _
    // Predicated region
    $region18: #{tpu_custom_call.1} parent=1 // pred_check
      _
    $region19: #{tpu_custom_call.1} parent=1 // pred_check_branch
      %41 = sbr.rel (0) target = $region21
    $region20: #{tpu_custom_call.1} parent=1 // pred_region
      %42 = dma.done [#allocation6], 3072
    $region21: #{tpu_custom_call.1} parent=1 // pred_fallthru
      _
    %v44 = vld [vmem:[#allocation2] sm:$0xff]
    %v45 = vld [vmem:[#allocation2 + $0x8] sm:$0xf]
    %v46 = vld [vmem:[#allocation2 + $0xc] sm:$0xff]
    %v47 = vld [vmem:[#allocation2 + $0x14] sm:$0xf]
    %v48 = vld [vmem:[#allocation5] sm:$0xf]
    %v49 = vld [vmem:[#allocation5 + $0x4] sm:$0xf]
    %v50 = vld [vmem:[#allocation5 + $0x8] sm:$0xf]
    %v51 = vld [vmem:[#allocation5 + $0xc] sm:$0xf]
    %v52 = vld [vmem:[#allocation5 + $0x10] sm:$0xf]
    %v53 = vld [vmem:[#allocation5 + $0x14] sm:$0xf]
    %v54 = vld [vmem:[#allocation5 + $0x18] sm:$0xf]
    %v55 = vld [vmem:[#allocation5 + $0x1c] sm:$0xf]
    %v56 = vld [vmem:[#allocation5 + $0x20] sm:$0xf]
    %v57 = vld [vmem:[#allocation5 + $0x24] sm:$0xf]
    %v58 = vld [vmem:[#allocation5 + $0x28] sm:$0xf]
    %v59 = vld [vmem:[#allocation5 + $0x2c] sm:$0xf]
    %v60 = vld [vmem:[#allocation5 + $0x30] sm:$0xf]
    %v61 = vld [vmem:[#allocation5 + $0x34] sm:$0xf]
    %v62 = vld [vmem:[#allocation5 + $0x38] sm:$0xf]
    %v63 = vld [vmem:[#allocation5 + $0x3c] sm:$0xf]
    %v64 = vld [vmem:[#allocation5 + $0x40] sm:$0xf]
    %v65 = vld [vmem:[#allocation5 + $0x44] sm:$0xf]
    %v66 = vld [vmem:[#allocation5 + $0x48] sm:$0xf]
    %v67 = vld [vmem:[#allocation5 + $0x4c] sm:$0xf]
    %v68 = vld [vmem:[#allocation5 + $0x50] sm:$0xf]
    %v69 = vld [vmem:[#allocation5 + $0x54] sm:$0xf]
    %v70 = vld [vmem:[#allocation5 + $0x58] sm:$0xf]
    %v71 = vld [vmem:[#allocation5 + $0x5c] sm:$0xf]
    %v72 = vld [vmem:[#allocation5 + $0x60] sm:$0xf]
    %v73 = vld [vmem:[#allocation5 + $0x64] sm:$0xf]
    %v74 = vld [vmem:[#allocation5 + $0x68] sm:$0xf]
    %v75 = vld [vmem:[#allocation5 + $0x6c] sm:$0xf]
    %v76 = vld [vmem:[#allocation5 + $0x70] sm:$0xf]
    %v77 = vld [vmem:[#allocation5 + $0x74] sm:$0xf]
    %v78 = vld [vmem:[#allocation5 + $0x78] sm:$0xf]
    %v79 = vld [vmem:[#allocation5 + $0x7c] sm:$0xf]
    %v80 = vld [vmem:[#allocation5 + $0x80] sm:$0xf]
    %v81 = vld [vmem:[#allocation5 + $0x84] sm:$0xf]
    %v82 = vld [vmem:[#allocation5 + $0x88] sm:$0xf]
    %v83 = vld [vmem:[#allocation5 + $0x8c] sm:$0xf]
    %v84 = vld [vmem:[#allocation5 + $0x90] sm:$0xf]
    %v85 = vld [vmem:[#allocation5 + $0x94] sm:$0xf]
    %v86 = vld [vmem:[#allocation5 + $0x98] sm:$0xf]
    %v87 = vld [vmem:[#allocation5 + $0x9c] sm:$0xf]
    %v88 = vld [vmem:[#allocation5 + $0xa0] sm:$0xf]
    %v89 = vld [vmem:[#allocation5 + $0xa4] sm:$0xf]
    %v90 = vld [vmem:[#allocation5 + $0xa8] sm:$0xf]
    %v91 = vld [vmem:[#allocation5 + $0xac] sm:$0xf]
    %v92 = vld [vmem:[#allocation5 + $0xb0] sm:$0xf]
    %v93 = vld [vmem:[#allocation5 + $0xb4] sm:$0xf]
    %v94 = vld [vmem:[#allocation5 + $0xb8] sm:$0xf]
    %v95 = vld [vmem:[#allocation5 + $0xbc] sm:$0xf]
    %v96 = vld [vmem:[%s2] sm:$0x1]
    %v98 = vlaneseq
    %v99 = vshrl.u32 %v98, 7
    %v100 = vsub.s32 0, %v99
    %v101 = vrot.slane %v96, %v100
    %v107 = vunpack.c.l.b16 %v44
    %v108 = vunpack.c.h.b16 %v44
    %v109 = vunpack.c.l.b16 %v45
    %v110 = vunpack.c.l.b16 %v46
    %v111 = vunpack.c.h.b16 %v46
    %v112 = vunpack.c.l.b16 %v47
    %v113 = vpack.c.b16 %v110, %v107
    %v114 = vpack.c.b16 %v111, %v108
    %v115 = vpack.c.b16 %v112, %v109
    %v167 = vunpack.c.l.b16 %v48
    %v168 = vunpack.c.l.b16 %v49
    %v169 = vunpack.c.l.b16 %v50
    %v170 = vunpack.c.l.b16 %v51
    %v171 = vunpack.c.l.b16 %v52
    %v172 = vunpack.c.l.b16 %v53
    %v173 = vunpack.c.l.b16 %v54
    %v174 = vunpack.c.l.b16 %v55
    %v175 = vunpack.c.l.b16 %v56
    %v176 = vunpack.c.l.b16 %v57
    %v177 = vunpack.c.l.b16 %v58
    %v178 = vunpack.c.l.b16 %v59
    %v179 = vunpack.c.l.b16 %v60
    %v180 = vunpack.c.l.b16 %v61
    %v181 = vunpack.c.l.b16 %v62
    %v182 = vunpack.c.l.b16 %v63
    %v183 = vunpack.c.l.b16 %v64
    %v184 = vunpack.c.l.b16 %v65
    %v185 = vunpack.c.l.b16 %v66
    %v186 = vunpack.c.l.b16 %v67
    %v187 = vunpack.c.l.b16 %v68
    %v188 = vunpack.c.l.b16 %v69
    %v189 = vunpack.c.l.b16 %v70
    %v190 = vunpack.c.l.b16 %v71
    %v191 = vunpack.c.l.b16 %v72
    %v192 = vunpack.c.l.b16 %v73
    %v193 = vunpack.c.l.b16 %v74
    %v194 = vunpack.c.l.b16 %v75
    %v195 = vunpack.c.l.b16 %v76
    %v196 = vunpack.c.l.b16 %v77
    %v197 = vunpack.c.l.b16 %v78
    %v198 = vunpack.c.l.b16 %v79
    %v199 = vunpack.c.l.b16 %v80
    %v200 = vunpack.c.l.b16 %v81
    %v201 = vunpack.c.l.b16 %v82
    %v202 = vunpack.c.l.b16 %v83
    %v203 = vunpack.c.l.b16 %v84
    %v204 = vunpack.c.l.b16 %v85
    %v205 = vunpack.c.l.b16 %v86
    %v206 = vunpack.c.l.b16 %v87
    %v207 = vunpack.c.l.b16 %v88
    %v208 = vunpack.c.l.b16 %v89
    %v209 = vunpack.c.l.b16 %v90
    %v210 = vunpack.c.l.b16 %v91
    %v211 = vunpack.c.l.b16 %v92
    %v212 = vunpack.c.l.b16 %v93
    %v213 = vunpack.c.l.b16 %v94
    %v214 = vunpack.c.l.b16 %v95
    %v215 = vpack.c.b16 %v168, %v167
    %v216 = vpack.c.b16 %v170, %v169
    %v217 = vpack.c.b16 %v172, %v171
    %v218 = vpack.c.b16 %v174, %v173
    %v219 = vpack.c.b16 %v176, %v175
    %v220 = vpack.c.b16 %v178, %v177
    %v221 = vpack.c.b16 %v180, %v179
    %v222 = vpack.c.b16 %v182, %v181
    %v223 = vpack.c.b16 %v184, %v183
    %v224 = vpack.c.b16 %v186, %v185
    %v225 = vpack.c.b16 %v188, %v187
    %v226 = vpack.c.b16 %v190, %v189
    %v227 = vpack.c.b16 %v192, %v191
    %v228 = vpack.c.b16 %v194, %v193
    %v229 = vpack.c.b16 %v196, %v195
    %v230 = vpack.c.b16 %v198, %v197
    %v231 = vpack.c.b16 %v200, %v199
    %v232 = vpack.c.b16 %v202, %v201
    %v233 = vpack.c.b16 %v204, %v203
    %v234 = vpack.c.b16 %v206, %v205
    %v235 = vpack.c.b16 %v208, %v207
    %v236 = vpack.c.b16 %v210, %v209
    %v237 = vpack.c.b16 %v212, %v211
    %v238 = vpack.c.b16 %v214, %v213
    %263 = vmatprep.subr.bf16.mxu0 0
    %264 = vmatpush1.bf16.msra.mxu0 %v222
    %265 = vmatprep.subr.bf16.mxu0 0
    %266 = vmatpush1.bf16.msra.mxu0 %v221
    %267 = vmatprep.subr.bf16.mxu0 0
    %268 = vmatpush1.bf16.msra.mxu0 %v220
    %269 = vmatprep.subr.bf16.mxu0 0
    %270 = vmatpush1.bf16.msra.mxu0 %v219
    %271 = vmatprep.subr.bf16.mxu0 0
    %272 = vmatpush1.bf16.msra.mxu0 %v218
    %273 = vmatprep.subr.bf16.mxu0 0
    %274 = vmatpush1.bf16.msra.mxu0 %v217
    %275 = vmatprep.subr.bf16.mxu0 0
    %276 = vmatpush1.bf16.msra.mxu0 %v216
    %277 = vmatprep.subr.bf16.mxu0 0
    %278 = vmatpush1.bf16.msra.mxu0 %v215
    %279 = vmatprep.subr.bf16.mxu0 0
    %280 = vmatpush2.bf16.msra.mxu0 %v230
    %281 = vmatprep.subr.bf16.mxu0 0
    %282 = vmatpush2.bf16.msra.mxu0 %v229
    %283 = vmatprep.subr.bf16.mxu0 0
    %284 = vmatpush2.bf16.msra.mxu0 %v228
    %285 = vmatprep.subr.bf16.mxu0 0
    %286 = vmatpush2.bf16.msra.mxu0 %v227
    %287 = vmatprep.subr.bf16.mxu0 0
    %288 = vmatpush2.bf16.msra.mxu0 %v226
    %289 = vmatprep.subr.bf16.mxu0 0
    %290 = vmatpush2.bf16.msra.mxu0 %v225
    %291 = vmatprep.subr.bf16.mxu0 0
    %292 = vmatpush2.bf16.msra.mxu0 %v224
    %293 = vmatprep.subr.bf16.mxu0 0
    %294 = vmatpush2.bf16.msra.mxu0 %v223
    %295 = vmatprep.mubr.bf16.mxu0 %v114
    %296 = vmatmul.mubr.bf16.gmra.mxu0 %v113
    %v297 = vpop.f32.mrf.mxu0
    %v298 = vadd.f32 %v101, %v297
    %v299 = vpop.f32.mrf.mxu0
    %v300 = vpop.f32.mrf.mxu0
    %v301 = vadd.f32 %v101, %v300
    %v302 = vpop.f32.mrf.mxu0
    %303 = vdwg.mxu0
    %304 = vmatprep.subr.bf16.mxu0 0
    %305 = vmatpush1.bf16.msra.mxu0 %v238
    %306 = vmatprep.subr.bf16.mxu0 0
    %307 = vmatpush1.bf16.msra.mxu0 %v237
    %308 = vmatprep.subr.bf16.mxu0 0
    %309 = vmatpush1.bf16.msra.mxu0 %v236
    %310 = vmatprep.subr.bf16.mxu0 0
    %311 = vmatpush1.bf16.msra.mxu0 %v235
    %312 = vmatprep.subr.bf16.mxu0 0
    %313 = vmatpush1.bf16.msra.mxu0 %v234
    %314 = vmatprep.subr.bf16.mxu0 0
    %315 = vmatpush1.bf16.msra.mxu0 %v233
    %316 = vmatprep.subr.bf16.mxu0 0
    %317 = vmatpush1.bf16.msra.mxu0 %v232
    %318 = vmatprep.subr.bf16.mxu0 0
    %319 = vmatpush1.bf16.msra.mxu0 %v231
    %320 = vmatprep.subr.bf16.mxu0 0
    %321 = vmatpush2.bf16.msra.mxu0 0
    %322 = vmatprep.subr.bf16.mxu0 0
    %323 = vmatpush2.bf16.msra.mxu0 0
    %324 = vmatprep.subr.bf16.mxu0 0
    %325 = vmatpush2.bf16.msra.mxu0 0
    %326 = vmatprep.subr.bf16.mxu0 0
    %327 = vmatpush2.bf16.msra.mxu0 0
    %328 = vmatprep.subr.bf16.mxu0 0
    %329 = vmatpush2.bf16.msra.mxu0 0
    %330 = vmatprep.subr.bf16.mxu0 0
    %331 = vmatpush2.bf16.msra.mxu0 0
    %332 = vmatprep.subr.bf16.mxu0 0
    %333 = vmatpush2.bf16.msra.mxu0 0
    %334 = vmatprep.subr.bf16.mxu0 0
    %335 = vmatpush2.bf16.msra.mxu0 0
    %336 = vmatprep.mubr.bf16.mxu0 0
    %337 = vmatmul.mubr.bf16.gmra.mxu0 %v115
    %v338 = vpop.f32.mrf.mxu0
    %v339 = vadd.f32 %v298, %v338
    %v340 = vpop.f32.mrf.mxu0
    %v341 = vpop.f32.mrf.mxu0
    %v342 = vadd.f32 %v301, %v341
    %v343 = vpop.f32.mrf.mxu0
    %344 = vdwg.mxu0
    %345 = vst [vmem:[#allocation7] sm:$0xff] %v339
    %346 = vst [vmem:[#allocation7 + $0x8] sm:$0xff] %v342
    // Predicated region
    $region22: #{tpu_custom_call.1} parent=1 // pred_check
      _
    $region23: #{tpu_custom_call.1} parent=1 // pred_check_branch
      %348 = sbr.rel (0) target = $region25
    $region24: #{tpu_custom_call.1} parent=1 // pred_region
      %s350 = ssub.s32 256, 256
      %351 = vsyncadd [#allocation4], %s350
      %s352 = sshll.u32 [#allocation7], 4
      %s353 = int_to_ptr.vmem [resolvable:$true] %s352
      %358 = dma.vmem_to_hbm [thread:$0]  %s353, 256, %s3, [#allocation4], 128, 128, 8
    $region25: #{tpu_custom_call.1} parent=1 // pred_fallthru
      _
    // Predicated region
    $region26: #{tpu_custom_call.1} parent=1 // pred_check
      _
    $region27: #{tpu_custom_call.1} parent=1 // pred_check_branch
      %360 = sbr.rel (0) target = $region29
    $region28: #{tpu_custom_call.1} parent=1 // pred_region
      %361 = dma.done [#allocation4], 256
    $region29: #{tpu_custom_call.1} parent=1 // pred_fallthru
      _
    %362 = vsyncpa [#allocation3], 1
    %363 = vsyncpa [#allocation6], 1
    %364 = vsyncpa [#allocation4], 1

</llo_original>
